<compile_context>
chip_gen: v5e
topology: v5e:2x2
jax: 0.10.0
libtpu: 0.0.40
codegen_flags: <defaults>
</compile_context>

<pallas_src>
import numpy as np
import jax
import jax.numpy as jnp
from jax import lax
from jax.experimental import pallas as pl
from jax.experimental.pallas import tpu as pltpu

_BIG = 2 ** 30


# --------------------------------------------------------------------------------------
# Kernel
# --------------------------------------------------------------------------------------
def _make_cl_kernel(tau, n_true):
    half_tau = 0.5 * float(tau)

    def kernel(ec_ref, ert_ref, invc_ref, invrh_ref, yj_ref, yi_ref,
               jpos_ref, zcnt_ref, out_ref, gram_sc, m_sc, l_sc, p_sc):
        k_blk = pl.program_id(1)
        d_blk = pl.program_id(2)
        nk = pl.num_programs(1)
        nd = pl.num_programs(2)
        tk = ec_ref.shape[0]

        @pl.when(jnp.logical_and(k_blk == 0, d_blk == 0))
        def _():
            # zero slots always exist in a loss_temp row -> running max starts at 0.0
            m_sc[...] = jnp.zeros_like(m_sc)
            l_sc[...] = jnp.zeros_like(l_sc)
            p_sc[...] = jnp.zeros_like(p_sc)

        @pl.when(d_blk == 0)
        def _():
            gram_sc[...] = jnp.zeros_like(gram_sc)

        # MXU: bf16 x bf16 -> f32 Gram partial sum.  Both operands arrive in the preferred
        # layout (LHS contracts on lanes, RHS on sublanes) -> no in-kernel transpose.
        gram_sc[...] += lax.dot_general(
            ec_ref[...], ert_ref[...], (((1,), (0,)), ((), ())),
            preferred_element_type=jnp.float32)

        @pl.when(d_blk == nd - 1)
        def _():
            # sims = (cos + 1) * 0.5 * tau ; invrh already folds 0.5*tau.
            sims = gram_sc[...] * invc_ref[...] * invrh_ref[...] + half_tau   # (tk, tm)

            yj = yj_ref[...]                                   # (tk, 1) column labels
            yi = yi_ref[...]                                   # (1, tm) row labels
            col_ids = k_blk * tk + lax.broadcasted_iota(jnp.int32, (tk, 1), 0)
            col_valid = col_ids < n_true                       # drop padded columns
            neg_mask = jnp.logical_and(yj != yi, col_valid)

            # online logsumexp over negatives (exp(-inf) = 0 is NaN-safe)
            neg_vals = jnp.where(neg_mask, sims, -jnp.inf)
            m_prev = m_sc[...]
            m_new = jnp.maximum(m_prev, jnp.max(neg_vals, axis=0, keepdims=True))
            l_sc[...] = (jnp.exp(m_prev - m_new) * l_sc[...]
                         + jnp.sum(jnp.exp(neg_vals - m_new), axis=0, keepdims=True))
            m_sc[...] = m_new

            # first positive: its global column index was precomputed in the wrapper,
            # so extracting its similarity is one select + one reduce.
            pos_hit = col_ids == jpos_ref[...]                 # (tk, tm)
            p_sc[...] += jnp.sum(jnp.where(pos_hit, sims, 0.0), axis=0, keepdims=True)

        @pl.when(jnp.logical_and(k_blk == nk - 1, d_blk == nd - 1))
        def _():
            p = p_sc[...]                      # slot-0 value (stays 0 if no positive exists)
            m_neg = m_sc[...]
            m_tot = jnp.maximum(m_neg, p)      # >= 0, also covers the zero slots
            sum_exp = (jnp.exp(p - m_tot)
                       + l_sc[...] * jnp.exp(m_neg - m_tot)
                       + zcnt_ref[...] * jnp.exp(-m_tot))
            # -log_softmax(row)[0] = logsumexp(row) - row[0]   (lane-dense (1, tm) write)
            out_ref[...] = m_tot + jnp.log(sum_exp) - p

    return kernel


# --------------------------------------------------------------------------------------
# Tile planning
# --------------------------------------------------------------------------------------
def _round_up(x, m):
    return ((x + m - 1) // m) * m


def _vmem_budget():
    """(planning budget, vmem_limit_bytes) derived from the actual chip's VMEM capacity."""
    cap = 64 << 20                      # assume the smallest current generation if unknown
    try:
        cap = int(getattr(pltpu.get_tpu_info(), "vmem_capacity_bytes", cap))
    except Exception:
        pass
    limit = min(int(cap * 0.85), cap - (16 << 20))
    limit = max(limit, 32 << 20)
    budget = int(limit * 0.65)
    return budget, limit


def _vmem_est(tm, tk, td):
    """Conservative VMEM estimate including scratch and epilogue temporaries."""
    bf16, f32 = 2, 4
    operands = 2 * (tk * td + td * tm) * bf16          # double-buffered matmul blocks
    vectors = 2 * (4 * tm + 2 * tk) * f32              # labels / inv norms / jpos / zcnt
    out_buf = 2 * tm * f32
    scratch = tk * tm * f32 + 3 * tm * f32             # Gram accumulator + per-row state
    temps = 6 * tk * tm * f32                          # sims / masks / exp temporaries
    return operands + vectors + out_buf + scratch + temps


def _plan_tiles(n, d, budget):
    """Return (n_row_pad, n_col_pad, d_pad, tm, tk, td)."""
    d_pad = _round_up(max(d, 1), 128)

    def td_options():                                   # d_pad first: no row re-streaming
        opts = [d_pad]
        for t in (8192, 4096, 2048, 1024, 512, 256, 128):
            if t < d_pad and d_pad % t == 0:
                opts.append(t)
        return opts

    nr = _round_up(max(n, 1), 8)        # rows: lane dims only -> 8-sublane granule is enough
    nc = _round_up(max(n, 1), 16)       # cols: bf16 sublane dim -> 16 granule
    if nc <= 256:
        # Small-N fast path (intended use: tens of layer embeddings): one row & column block.
        for td in td_options():
            if _vmem_est(nr, nc, td) <= budget:
                return nr, nc, d_pad, nr, nc, td
        return nr, nc, d_pad, nr, nc, 128

    # Large-N regime: prefer large row blocks (column-stream HBM traffic ~ (N/tm)*N*D), then a
    # full-D block (row operand fetched once per row block), then large column blocks.
    n128 = _round_up(n, 128)
    tm_opts = (512, 256, 128) if budget >= (48 << 20) else (256, 128)
    for tm in tm_opts:
        if tm > n128:
            continue
        if tm != 128 and _round_up(n, tm) // tm < 2:    # keep >=2 row blocks (megacore)
            continue
        for td in td_options():
            for tk in (1024, 512, 256, 128):
                if tk > n128:
                    continue
                if _vmem_est(tm, tk, td) <= budget:
                    return _round_up(n, tm), _round_up(n, tk), d_pad, tm, tk, td
    return n128, n128, d_pad, 128, 128, 128


# --------------------------------------------------------------------------------------
# Wrapper
# --------------------------------------------------------------------------------------
def cl_loss_pallas(layer_embeds, y_true, tau):
    """Pallas TPU implementation of CL.forward.

    layer_embeds: (N, D) array (row i = layer_embeds[i].view(-1)) or a list/tuple of
    per-layer arrays (each is flattened).  y_true: (N,) integer labels.
    """
    if isinstance(layer_embeds, (list, tuple)):
        e = jnp.stack([jnp.ravel(jnp.asarray(x, jnp.float32)) for x in layer_embeds])
    else:
        e = jnp.asarray(layer_embeds, jnp.float32)
        e = e.reshape(e.shape[0], -1)
    n, d = e.shape
    y = jnp.asarray(y_true, jnp.int32).reshape(n)
    half_tau = 0.5 * float(tau)

    # ---- O(N*D) / O(N^2)-bool wrapper metadata (tiny vs. the O(N^2*D) kernel work) ----
    inv = 1.0 / jnp.maximum(jnp.sqrt(jnp.sum(e * e, axis=1)), 1e-8)   # clamped 1/||e_i||
    idx = jnp.arange(n, dtype=jnp.int32)
    same = y[:, None] == y[None, :]
    pos_mat = jnp.logical_and(same, idx[:, None] != idx[None, :])
    has_pos = jnp.any(pos_mat, axis=1)
    jpos = jnp.where(has_pos, jnp.argmax(pos_mat, axis=1).astype(jnp.int32), _BIG)
    nneg = jnp.sum(jnp.logical_not(same), axis=1).astype(jnp.float32)
    zcnt = (2.0 * n - 2.0) - nneg                       # zero slots of each loss_temp row

    budget, vmem_limit = _vmem_budget()
    n_row_pad, n_col_pad, d_pad, tm, tk, td = _plan_tiles(n, d, budget)
    est = _vmem_est(tm, tk, td)
    if est > vmem_limit:
        raise ValueError(
            f"CL Pallas kernel: minimal tiling needs ~{est / 2**20:.1f} MiB VMEM, "
            f"limit is {vmem_limit / 2**20:.1f} MiB (N={n}, D={d}).")

    # ---- padded operand / metadata arrays (bf16 MXU operands, f32 everything else) ----
    e_bf = e.astype(jnp.bfloat16)
    e_col = jnp.zeros((n_col_pad, d_pad), jnp.bfloat16).at[:n, :d].set(e_bf)
    e_rowT = jnp.zeros((d_pad, n_row_pad), jnp.bfloat16).at[:d, :n].set(e_bf.T)
    inv_c = jnp.zeros((n_col_pad, 1), jnp.float32).at[:n, 0].set(inv)
    inv_rh = jnp.zeros((1, n_row_pad), jnp.float32).at[0, :n].set(inv * half_tau)
    y_col = jnp.full((n_col_pad, 1), -1, jnp.int32).at[:n, 0].set(y)
    y_row = jnp.full((1, n_row_pad), -2, jnp.int32).at[0, :n].set(y)
    jpos_a = jnp.full((1, n_row_pad), _BIG, jnp.int32).at[0, :n].set(jpos)
    zcnt_a = jnp.zeros((1, n_row_pad), jnp.float32).at[0, :n].set(zcnt)

    grid = (n_row_pad // tm, n_col_pad // tk, d_pad // td)

    per_row = pl.pallas_call(
        _make_cl_kernel(float(tau), n),
        out_shape=jax.ShapeDtypeStruct((grid[0], 1, tm), jnp.float32),
        grid_spec=pltpu.PrefetchScalarGridSpec(
            num_scalar_prefetch=0,
            grid=grid,
            in_specs=[
                pl.BlockSpec((tk, td), lambda i, k, dd: (k, dd)),   # E columns (bf16)
                pl.BlockSpec((td, tm), lambda i, k, dd: (dd, i)),   # E rows, pre-transposed (bf16)
                pl.BlockSpec((tk, 1), lambda i, k, dd: (k, 0)),     # 1/||e_j||
                pl.BlockSpec((1, tm), lambda i, k, dd: (0, i)),     # 0.5*tau/||e_i||
                pl.BlockSpec((tk, 1), lambda i, k, dd: (k, 0)),     # column labels
                pl.BlockSpec((1, tm), lambda i, k, dd: (0, i)),     # row labels
                pl.BlockSpec((1, tm), lambda i, k, dd: (0, i)),     # first-positive column id
                pl.BlockSpec((1, tm), lambda i, k, dd: (0, i)),     # zero-slot count
            ],
            out_specs=pl.BlockSpec((None, 1, tm), lambda i, k, dd: (i, 0, 0)),
            scratch_shapes=[
                pltpu.VMEM((tk, tm), jnp.float32),   # Gram accumulator (over D blocks)
                pltpu.VMEM((1, tm), jnp.float32),    # running max over negatives
                pltpu.VMEM((1, tm), jnp.float32),    # running sum of exp(neg - m)
                pltpu.VMEM((1, tm), jnp.float32),    # first-positive similarity
            ],
        ),
        compiler_params=pltpu.CompilerParams(
            dimension_semantics=("parallel", "arbitrary", "arbitrary"),
            vmem_limit_bytes=int(vmem_limit)),
    )(e_col, e_rowT, inv_c, inv_rh, y_col, y_row, jpos_a, zcnt_a)

    return jnp.sum(per_row.reshape(-1)[:n]) / n


# --------------------------------------------------------------------------------------
# Reference (direct numpy transcription of the PyTorch loops) and smoke test
# --------------------------------------------------------------------------------------
def cl_loss_reference(E, y, tau):
    E = np.asarray(E, dtype=np.float64)
    y = np.asarray(y)
    n = E.shape[0]
    T = np.zeros((n, 2 * n - 1), dtype=np.float64)
    for i in range(n):
        indice = 1
        pos = True
        for j in range(n):
            if i == j:
                continue
            ci, cj = E[i].ravel(), E[j].ravel()
            cos = float(np.dot(ci, cj) /
                        max(np.linalg.norm(ci) * np.linalg.norm(cj), 1e-8))
            if y[i] == y[j] and pos:
                T[i, 0] = (cos + 1.0) * 0.5 * tau
                pos = False
            elif y[i] != y[j]:
                T[i, indice] = (cos + 1.0) * 0.5 * tau
                indice += 1
    m = T.max(axis=1, keepdims=True)
    lse = m + np.log(np.exp(T - m).sum(axis=1, keepdims=True))
    neg_log_softmax = lse - T
    return float(np.sum(neg_log_softmax[:, 0]) / n)


if __name__ == "__main__":
    tau = 0.5
    key = jax.random.PRNGKey(0)
    k1, k2 = jax.random.split(key)

    # Primary case: 8 layer embeddings, each flattening to 32 features.
    e1 = jax.random.normal(k1, (8, 32), dtype=jnp.float32)
    y1 = jnp.array([0, 1, 0, 1, 0, 1, 0, 1], dtype=jnp.int32)
    loss1 = jax.block_until_ready(cl_loss_pallas(e1, y1, tau))
    ref1 = cl_loss_reference(np.asarray(e1), np.asarray(y1), tau)
    assert np.allclose(float(loss1), ref1, rtol=5e-3, atol=1e-3), (float(loss1), ref1)

    # Padding path: 10 embeddings (rows/cols padded to 8/16), 40 features (D padded to 128).
    e2 = jax.random.normal(k2, (10, 40), dtype=jnp.float32)
    y2 = jnp.array([0, 1, 2, 0, 1, 2, 0, 1, 2, 0], dtype=jnp.int32)
    loss2 = jax.block_until_ready(cl_loss_pallas(e2, y2, tau))
    ref2 = cl_loss_reference(np.asarray(e2), np.asarray(y2), tau)
    assert np.allclose(float(loss2), ref2, rtol=5e-3, atol=1e-3), (float(loss2), ref2)

    print("KERNEL_OK")
</pallas_src>

<mosaic_0001>
module attributes {stable_mosaic.version = 11 : i64} {
  func.func @kernel(%arg0: i32, %arg1: i32, %arg2: i32, %arg3: memref<16x128xbf16, #tpu.memory_space<vmem>>, %arg4: memref<128x8xbf16, #tpu.memory_space<vmem>>, %arg5: memref<16x1xf32, #tpu.memory_space<vmem>>, %arg6: memref<1x8xf32, #tpu.memory_space<vmem>>, %arg7: memref<16x1xi32, #tpu.memory_space<vmem>>, %arg8: memref<1x8xi32, #tpu.memory_space<vmem>>, %arg9: memref<1x8xi32, #tpu.memory_space<vmem>>, %arg10: memref<1x8xf32, #tpu.memory_space<vmem>>, %arg11: memref<1x1x8xf32, #tpu.memory_space<vmem>>, %arg12: memref<16x8xf32, #tpu.memory_space<vmem>>, %arg13: memref<1x8xf32, #tpu.memory_space<vmem>>, %arg14: memref<1x8xf32, #tpu.memory_space<vmem>>, %arg15: memref<1x8xf32, #tpu.memory_space<vmem>>) attributes {dimension_semantics = [#tpu.dimension_semantics<parallel>, #tpu.dimension_semantics<arbitrary>, #tpu.dimension_semantics<arbitrary>], iteration_bounds = array<i64: 1, 1, 1>, scalar_prefetch = 0 : i64, scratch_operands = 4 : i64, tpu.core_type = #tpu.core_type<tc>, window_params = [{transform_indices = @transform_0, window_bounds = array<i64: 16, 128>}, {transform_indices = @transform_1, window_bounds = array<i64: 128, 8>}, {transform_indices = @transform_2, window_bounds = array<i64: 16, 1>}, {transform_indices = @transform_3, window_bounds = array<i64: 1, 8>}, {transform_indices = @transform_4, window_bounds = array<i64: 16, 1>}, {transform_indices = @transform_5, window_bounds = array<i64: 1, 8>}, {transform_indices = @transform_6, window_bounds = array<i64: 1, 8>}, {transform_indices = @transform_7, window_bounds = array<i64: 1, 8>}, {transform_indices = @transform_8, window_bounds = array<i64: 1, 1, 8>}]} {
    %c0_i32 = arith.constant 0 : i32
    %0 = arith.cmpi eq, %arg1, %c0_i32 : i32
    %c0_i32_0 = arith.constant 0 : i32
    %1 = arith.cmpi eq, %arg2, %c0_i32_0 : i32
    %2 = arith.andi %0, %1 : i1
    %3 = arith.extui %2 : i1 to i32
    %c0_i32_1 = arith.constant 0 : i32
    %4 = arith.cmpi ne, %3, %c0_i32_1 : i32
    scf.if %4 {
      %cst_16 = arith.constant 0.000000e+00 : f32
      %22 = vector.broadcast %cst_16 : f32 to vector<1x8xf32>
      %c0_17 = arith.constant 0 : index
      %c0_18 = arith.constant 0 : index
      %23 = vector.load %arg13[%c0_17, %c0_18] : memref<1x8xf32, #tpu.memory_space<vmem>>, vector<1x8xf32>
      tpu.vector_store %arg13[%c0_17, %c0_18], %22 {strides = array<i32>} : memref<1x8xf32, #tpu.memory_space<vmem>>, vector<1x8xf32>,
      %cst_19 = arith.constant 0.000000e+00 : f32
      %24 = vector.broadcast %cst_19 : f32 to vector<1x8xf32>
      %c0_20 = arith.constant 0 : index
      %c0_21 = arith.constant 0 : index
      %25 = vector.load %arg14[%c0_20, %c0_21] : memref<1x8xf32, #tpu.memory_space<vmem>>, vector<1x8xf32>
      tpu.vector_store %arg14[%c0_20, %c0_21], %24 {strides = array<i32>} : memref<1x8xf32, #tpu.memory_space<vmem>>, vector<1x8xf32>,
      %cst_22 = arith.constant 0.000000e+00 : f32
      %26 = vector.broadcast %cst_22 : f32 to vector<1x8xf32>
      %c0_23 = arith.constant 0 : index
      %c0_24 = arith.constant 0 : index
      %27 = vector.load %arg15[%c0_23, %c0_24] : memref<1x8xf32, #tpu.memory_space<vmem>>, vector<1x8xf32>
      tpu.vector_store %arg15[%c0_23, %c0_24], %26 {strides = array<i32>} : memref<1x8xf32, #tpu.memory_space<vmem>>, vector<1x8xf32>,
    } else {
    }
    %c0_i32_2 = arith.constant 0 : i32
    %5 = arith.cmpi eq, %arg2, %c0_i32_2 : i32
    %6 = arith.extui %5 : i1 to i32
    %c0_i32_3 = arith.constant 0 : i32
    %7 = arith.cmpi ne, %6, %c0_i32_3 : i32
    scf.if %7 {
      %cst_16 = arith.constant 0.000000e+00 : f32
      %22 = vector.broadcast %cst_16 : f32 to vector<16x8xf32>
      %c0_17 = arith.constant 0 : index
      %c0_18 = arith.constant 0 : index
      %23 = vector.load %arg12[%c0_17, %c0_18] : memref<16x8xf32, #tpu.memory_space<vmem>>, vector<16x8xf32>
      tpu.vector_store %arg12[%c0_17, %c0_18], %22 {strides = array<i32>} : memref<16x8xf32, #tpu.memory_space<vmem>>, vector<16x8xf32>,
    } else {
    }
    %c0 = arith.constant 0 : index
    %c0_4 = arith.constant 0 : index
    %8 = vector.load %arg12[%c0, %c0_4] : memref<16x8xf32, #tpu.memory_space<vmem>>, vector<16x8xf32>
    %c0_5 = arith.constant 0 : index
    %c0_6 = arith.constant 0 : index
    %9 = vector.load %arg3[%c0_5, %c0_6] : memref<16x128xbf16, #tpu.memory_space<vmem>>, vector<16x128xbf16>
    %c0_7 = arith.constant 0 : index
    %c0_8 = arith.constant 0 : index
    %10 = vector.load %arg4[%c0_7, %c0_8] : memref<128x8xbf16, #tpu.memory_space<vmem>>, vector<128x8xbf16>
    %cst = arith.constant dense<0.000000e+00> : vector<16x8xf32>
    %11 = tpu.matmul %9, %10, %cst {dimension_numbers = #tpu.dot_dimension_numbers<[1], [0], [0], [1], [0, 0, 1, 1], [], []>} : vector<16x128xbf16>, vector<128x8xbf16>, vector<16x8xf32> -> vector<16x8xf32>
    %12 = arith.addf %8, %11 : vector<16x8xf32>
    %c0_9 = arith.constant 0 : index
    %c0_10 = arith.constant 0 : index
    %13 = vector.load %arg12[%c0_9, %c0_10] : memref<16x8xf32, #tpu.memory_space<vmem>>, vector<16x8xf32>
    tpu.vector_store %arg12[%c0_9, %c0_10], %12 {strides = array<i32>} : memref<16x8xf32, #tpu.memory_space<vmem>>, vector<16x8xf32>,
    %c0_i32_11 = arith.constant 0 : i32
    %14 = arith.cmpi eq, %arg2, %c0_i32_11 : i32
    %15 = arith.extui %14 : i1 to i32
    %c0_i32_12 = arith.constant 0 : i32
    %16 = arith.cmpi ne, %15, %c0_i32_12 : i32
    scf.if %16 {
      %c0_16 = arith.constant 0 : index
      %c0_17 = arith.constant 0 : index
      %22 = vector.load %arg12[%c0_16, %c0_17] : memref<16x8xf32, #tpu.memory_space<vmem>>, vector<16x8xf32>
      %c0_18 = arith.constant 0 : index
      %c0_19 = arith.constant 0 : index
      %23 = vector.load %arg5[%c0_18, %c0_19] : memref<16x1xf32, #tpu.memory_space<vmem>>, vector<16x1xf32>
      %24 = vector.broadcast %23 : vector<16x1xf32> to vector<16x8xf32>
      %25 = arith.mulf %22, %24 : vector<16x8xf32>
      %c0_20 = arith.constant 0 : index
      %c0_21 = arith.constant 0 : index
      %26 = vector.load %arg6[%c0_20, %c0_21] : memref<1x8xf32, #tpu.memory_space<vmem>>, vector<1x8xf32>
      %27 = vector.broadcast %26 : vector<1x8xf32> to vector<16x8xf32>
      %28 = arith.mulf %25, %27 : vector<16x8xf32>
      %cst_22 = arith.constant 2.500000e-01 : f32
      %29 = vector.broadcast %cst_22 : f32 to vector<16x8xf32>
      %30 = arith.addf %28, %29 : vector<16x8xf32>
      %c0_23 = arith.constant 0 : index
      %c0_24 = arith.constant 0 : index
      %31 = vector.load %arg7[%c0_23, %c0_24] : memref<16x1xi32, #tpu.memory_space<vmem>>, vector<16x1xi32>
      %c0_25 = arith.constant 0 : index
      %c0_26 = arith.constant 0 : index
      %32 = vector.load %arg8[%c0_25, %c0_26] : memref<1x8xi32, #tpu.memory_space<vmem>>, vector<1x8xi32>
      %c16_i32 = arith.constant 16 : i32
      %33 = arith.muli %arg1, %c16_i32 : i32
      %34 = tpu.iota {dimensions = array<i32: 0>} : vector<16x1xi32>
      %35 = vector.broadcast %33 : i32 to vector<16x1xi32>
      %36 = arith.addi %35, %34 : vector<16x1xi32>
      %c8_i32 = arith.constant 8 : i32
      %37 = vector.broadcast %c8_i32 : i32 to vector<16x1xi32>
      %38 = arith.cmpi slt, %36, %37 : vector<16x1xi32>
      %39 = vector.broadcast %31 : vector<16x1xi32> to vector<16x8xi32>
      %40 = vector.broadcast %32 : vector<1x8xi32> to vector<16x8xi32>
      %41 = arith.cmpi ne, %39, %40 : vector<16x8xi32>
      %42 = vector.broadcast %38 : vector<16x1xi1> to vector<16x8xi1>
      %43 = arith.andi %41, %42 : vector<16x8xi1>
      %cst_27 = arith.constant 0xFF800000 : f32
      %44 = vector.broadcast %cst_27 : f32 to vector<16x8xf32>
      %45 = arith.select %43, %30, %44 : vector<16x8xi1>, vector<16x8xf32>
      %c0_28 = arith.constant 0 : index
      %c0_29 = arith.constant 0 : index
      %46 = vector.load %arg13[%c0_28, %c0_29] : memref<1x8xf32, #tpu.memory_space<vmem>>, vector<1x8xf32>
      %cst_30 = arith.constant dense<0xFF800000> : vector<8xf32>
      %47 = vector.multi_reduction <maximumf>, %45, %cst_30 [0] : vector<16x8xf32> to vector<8xf32>
      %48 = vector.shape_cast %47 : vector<8xf32> to vector<1x8xf32>
      %49 = arith.maximumf %46, %48 : vector<1x8xf32>
      %50 = arith.subf %46, %49 : vector<1x8xf32>
      %51 = math.exp %50 : vector<1x8xf32>
      %c0_31 = arith.constant 0 : index
      %c0_32 = arith.constant 0 : index
      %52 = vector.load %arg14[%c0_31, %c0_32] : memref<1x8xf32, #tpu.memory_space<vmem>>, vector<1x8xf32>
      %53 = arith.mulf %51, %52 : vector<1x8xf32>
      %54 = vector.broadcast %49 : vector<1x8xf32> to vector<16x8xf32>
      %55 = arith.subf %45, %54 : vector<16x8xf32>
      %56 = math.exp %55 : vector<16x8xf32>
      %cst_33 = arith.constant dense<0.000000e+00> : vector<8xf32>
      %57 = vector.multi_reduction <add>, %56, %cst_33 [0] : vector<16x8xf32> to vector<8xf32>
      %58 = vector.shape_cast %57 : vector<8xf32> to vector<1x8xf32>
      %59 = arith.addf %53, %58 : vector<1x8xf32>
      %c0_34 = arith.constant 0 : index
      %c0_35 = arith.constant 0 : index
      %60 = vector.load %arg14[%c0_34, %c0_35] : memref<1x8xf32, #tpu.memory_space<vmem>>, vector<1x8xf32>
      tpu.vector_store %arg14[%c0_34, %c0_35], %59 {strides = array<i32>} : memref<1x8xf32, #tpu.memory_space<vmem>>, vector<1x8xf32>,
      %c0_36 = arith.constant 0 : index
      %c0_37 = arith.constant 0 : index
      %61 = vector.load %arg13[%c0_36, %c0_37] : memref<1x8xf32, #tpu.memory_space<vmem>>, vector<1x8xf32>
      tpu.vector_store %arg13[%c0_36, %c0_37], %49 {strides = array<i32>} : memref<1x8xf32, #tpu.memory_space<vmem>>, vector<1x8xf32>,
      %c0_38 = arith.constant 0 : index
      %c0_39 = arith.constant 0 : index
      %62 = vector.load %arg9[%c0_38, %c0_39] : memref<1x8xi32, #tpu.memory_space<vmem>>, vector<1x8xi32>
      %63 = vector.broadcast %36 : vector<16x1xi32> to vector<16x8xi32>
      %64 = vector.broadcast %62 : vector<1x8xi32> to vector<16x8xi32>
      %65 = arith.cmpi eq, %63, %64 : vector<16x8xi32>
      %c0_40 = arith.constant 0 : index
      %c0_41 = arith.constant 0 : index
      %66 = vector.load %arg15[%c0_40, %c0_41] : memref<1x8xf32, #tpu.memory_space<vmem>>, vector<1x8xf32>
      %cst_42 = arith.constant 0.000000e+00 : f32
      %67 = vector.broadcast %cst_42 : f32 to vector<16x8xf32>
      %68 = arith.select %65, %30, %67 : vector<16x8xi1>, vector<16x8xf32>
      %cst_43 = arith.constant dense<0.000000e+00> : vector<8xf32>
      %69 = vector.multi_reduction <add>, %68, %cst_43 [0] : vector<16x8xf32> to vector<8xf32>
      %70 = vector.shape_cast %69 : vector<8xf32> to vector<1x8xf32>
      %71 = arith.addf %66, %70 : vector<1x8xf32>
      %c0_44 = arith.constant 0 : index
      %c0_45 = arith.constant 0 : index
      %72 = vector.load %arg15[%c0_44, %c0_45] : memref<1x8xf32, #tpu.memory_space<vmem>>, vector<1x8xf32>
      tpu.vector_store %arg15[%c0_44, %c0_45], %71 {strides = array<i32>} : memref<1x8xf32, #tpu.memory_space<vmem>>, vector<1x8xf32>,
    } else {
    }
    %c0_i32_13 = arith.constant 0 : i32
    %17 = arith.cmpi eq, %arg1, %c0_i32_13 : i32
    %c0_i32_14 = arith.constant 0 : i32
    %18 = arith.cmpi eq, %arg2, %c0_i32_14 : i32
    %19 = arith.andi %17, %18 : i1
    %20 = arith.extui %19 : i1 to i32
    %c0_i32_15 = arith.constant 0 : i32
    %21 = arith.cmpi ne, %20, %c0_i32_15 : i32
    scf.if %21 {
      %c0_16 = arith.constant 0 : index
      %c0_17 = arith.constant 0 : index
      %22 = vector.load %arg15[%c0_16, %c0_17] : memref<1x8xf32, #tpu.memory_space<vmem>>, vector<1x8xf32>
      %c0_18 = arith.constant 0 : index
      %c0_19 = arith.constant 0 : index
      %23 = vector.load %arg13[%c0_18, %c0_19] : memref<1x8xf32, #tpu.memory_space<vmem>>, vector<1x8xf32>
      %24 = arith.maximumf %23, %22 : vector<1x8xf32>
      %25 = arith.subf %22, %24 : vector<1x8xf32>
      %26 = math.exp %25 : vector<1x8xf32>
      %c0_20 = arith.constant 0 : index
      %c0_21 = arith.constant 0 : index
      %27 = vector.load %arg14[%c0_20, %c0_21] : memref<1x8xf32, #tpu.memory_space<vmem>>, vector<1x8xf32>
      %28 = arith.subf %23, %24 : vector<1x8xf32>
      %29 = math.exp %28 : vector<1x8xf32>
      %30 = arith.mulf %27, %29 : vector<1x8xf32>
      %31 = arith.addf %26, %30 : vector<1x8xf32>
      %c0_22 = arith.constant 0 : index
      %c0_23 = arith.constant 0 : index
      %32 = vector.load %arg10[%c0_22, %c0_23] : memref<1x8xf32, #tpu.memory_space<vmem>>, vector<1x8xf32>
      %cst_24 = arith.constant 0.000000e+00 : f32
      %33 = vector.broadcast %cst_24 : f32 to vector<1x8xf32>
      %34 = arith.subf %33, %24 : vector<1x8xf32>
      %35 = math.exp %34 : vector<1x8xf32>
      %36 = arith.mulf %32, %35 : vector<1x8xf32>
      %37 = arith.addf %31, %36 : vector<1x8xf32>
      %38 = math.log %37 : vector<1x8xf32>
      %39 = arith.addf %24, %38 : vector<1x8xf32>
      %40 = arith.subf %39, %22 : vector<1x8xf32>
      %c0_25 = arith.constant 0 : index
      %c0_26 = arith.constant 0 : index
      %c0_27 = arith.constant 0 : index
      %41 = vector.load %arg11[%c0_25, %c0_26, %c0_27] : memref<1x1x8xf32, #tpu.memory_space<vmem>>, vector<1x1x8xf32>
      %42 = vector.shape_cast %41 : vector<1x1x8xf32> to vector<1x8xf32>
      %43 = vector.shape_cast %40 : vector<1x8xf32> to vector<1x1x8xf32>
      tpu.vector_store %arg11[%c0_25, %c0_26, %c0_27], %43 {strides = array<i32>} : memref<1x1x8xf32, #tpu.memory_space<vmem>>, vector<1x1x8xf32>,
    } else {
    }
    return
  }
  func.func @transform_0(%arg0: i32, %arg1: i32, %arg2: i32) -> (i32, i32) {
    %c0_i32 = arith.constant 0 : i32
    return %arg1, %arg2 : i32, i32
  }
  func.func @transform_1(%arg0: i32, %arg1: i32, %arg2: i32) -> (i32, i32) {
    %c0_i32 = arith.constant 0 : i32
    return %arg2, %arg0 : i32, i32
  }
  func.func @transform_2(%arg0: i32, %arg1: i32, %arg2: i32) -> (i32, i32) {
    %c0_i32 = arith.constant 0 : i32
    %c0_i32_0 = arith.constant 0 : i32
    return %arg1, %c0_i32 : i32, i32
  }
  func.func @transform_3(%arg0: i32, %arg1: i32, %arg2: i32) -> (i32, i32) {
    %c0_i32 = arith.constant 0 : i32
    %c0_i32_0 = arith.constant 0 : i32
    return %c0_i32, %arg0 : i32, i32
  }
  func.func @transform_4(%arg0: i32, %arg1: i32, %arg2: i32) -> (i32, i32) {
    %c0_i32 = arith.constant 0 : i32
    %c0_i32_0 = arith.constant 0 : i32
    return %arg1, %c0_i32 : i32, i32
  }
  func.func @transform_5(%arg0: i32, %arg1: i32, %arg2: i32) -> (i32, i32) {
    %c0_i32 = arith.constant 0 : i32
    %c0_i32_0 = arith.constant 0 : i32
    return %c0_i32, %arg0 : i32, i32
  }
  func.func @transform_6(%arg0: i32, %arg1: i32, %arg2: i32) -> (i32, i32) {
    %c0_i32 = arith.constant 0 : i32
    %c0_i32_0 = arith.constant 0 : i32
    return %c0_i32, %arg0 : i32, i32
  }
  func.func @transform_7(%arg0: i32, %arg1: i32, %arg2: i32) -> (i32, i32) {
    %c0_i32 = arith.constant 0 : i32
    %c0_i32_0 = arith.constant 0 : i32
    return %c0_i32, %arg0 : i32, i32
  }
  func.func @transform_8(%arg0: i32, %arg1: i32, %arg2: i32) -> (i32, i32, i32) {
    %c0_i32 = arith.constant 0 : i32
    %c0_i32_0 = arith.constant 0 : i32
    %c0_i32_1 = arith.constant 0 : i32
    return %arg0, %c0_i32, %c0_i32_0 : i32, i32, i32
  }
}

</mosaic_0001>

<llo_original>
// kernel: tpu_custom_call.1
$region0: #{tpu_custom_call.1}
  #allocation0 [shape = 'u32[]', space=smem, size = 0x4, offset = 0x4, fixed_abs, tag = 'smem constant byte address 0x4 - core index']
  #allocation1 [shape = 'u32[72,128]{1,0:T(1,128)}', space=vmem, size = 0x9000, scoped, tag = 'internal scratch']
  #allocation2 [shape = 'f32[16,8]{1,0:T(8,128)}', space=vmem, size = 0x2000, scoped, tag = 'scratch operand']
  #allocation3 [shape = 'f32[1,8]{1,0:T(1,128)}', space=vmem, size = 0x200, scoped, tag = 'scratch operand']
  #allocation4 [shape = 'f32[1,8]{1,0:T(1,128)}', space=vmem, size = 0x200, scoped, tag = 'scratch operand']
  #allocation5 [shape = 'f32[1,8]{1,0:T(1,128)}', space=vmem, size = 0x200, scoped, tag = 'scratch operand']
  %s0 = inlined_call_operand.vmem [shape: bf16[16,128], index: 0, kind: input, shape index: {}]
  %s1 = inlined_call_operand.vmem [shape: bf16[128,8], index: 1, kind: input, shape index: {}]
  %s2 = inlined_call_operand.vmem [shape: f32[16,1], index: 2, kind: input, shape index: {}]
  %s3 = inlined_call_operand.vmem [shape: f32[1,8], index: 3, kind: input, shape index: {}]
  %s4 = inlined_call_operand.vmem [shape: s32[16,1], index: 4, kind: input, shape index: {}]
  %s5 = inlined_call_operand.vmem [shape: s32[1,8], index: 5, kind: input, shape index: {}]
  %s6 = inlined_call_operand.vmem [shape: s32[1,8], index: 6, kind: input, shape index: {}]
  %s7 = inlined_call_operand.vmem [shape: f32[1,8], index: 7, kind: input, shape index: {}]
  %s8 = inlined_call_operand.hbm [shape: f32[1,1,8], index: 8, kind: output, shape index: {}]
  %s9 = sld [smem:[#allocation0]]
  $region58: #{tpu_custom_call.1} parent=0
    _
  %s11 = ssub.s32 1, %s9
  %s12 = scalar_select 0, %s11, %s9
  $region1: #{tpu_custom_call.1} parent=0
    #allocation6 [shape = 'u8[512]{0}', space=vmem, size = 0x400, scoped, tag = 'output window, operand 0, single buffered']
    #allocation7 [shape = 's32[1]{0}', space=sflag, size = 0x4, scoped, tag = 'scoped memory for tpu_custom_call.1']
    %13 = vsyncpa [#allocation7], 0
    // Predicated region
    $region2: #{tpu_custom_call.1} parent=1 // pred_check
      _
    $region3: #{tpu_custom_call.1} parent=1 // pred_check_branch
      %15 = sbr.rel (0) target = $region5
    $region4: #{tpu_custom_call.1} parent=1 // pred_region
      _
    $region5: #{tpu_custom_call.1} parent=1 // pred_fallthru
      _
    // Predicated region
    $region6: #{tpu_custom_call.1} parent=1 // pred_check
      _
    $region7: #{tpu_custom_call.1} parent=1 // pred_check_branch
      %17 = sbr.rel (0) target = $region9
    $region8: #{tpu_custom_call.1} parent=1 // pred_region
      _
    $region9: #{tpu_custom_call.1} parent=1 // pred_fallthru
      _
    // Predicated region
    $region10: #{tpu_custom_call.1} parent=1 // pred_check
      _
    $region11: #{tpu_custom_call.1} parent=1 // pred_check_branch
      %19 = sbr.rel (0) target = $region13
    $region12: #{tpu_custom_call.1} parent=1 // pred_region
      _
    $region13: #{tpu_custom_call.1} parent=1 // pred_fallthru
      _
    // Predicated region
    $region14: #{tpu_custom_call.1} parent=1 // pred_check
      _
    $region15: #{tpu_custom_call.1} parent=1 // pred_check_branch
      %21 = sbr.rel (0) target = $region17
    $region16: #{tpu_custom_call.1} parent=1 // pred_region
      _
    $region17: #{tpu_custom_call.1} parent=1 // pred_fallthru
      _
    // Predicated region
    $region18: #{tpu_custom_call.1} parent=1 // pred_check
      _
    $region19: #{tpu_custom_call.1} parent=1 // pred_check_branch
      %23 = sbr.rel (0) target = $region21
    $region20: #{tpu_custom_call.1} parent=1 // pred_region
      _
    $region21: #{tpu_custom_call.1} parent=1 // pred_fallthru
      _
    // Predicated region
    $region22: #{tpu_custom_call.1} parent=1 // pred_check
      _
    $region23: #{tpu_custom_call.1} parent=1 // pred_check_branch
      %25 = sbr.rel (0) target = $region25
    $region24: #{tpu_custom_call.1} parent=1 // pred_region
      _
    $region25: #{tpu_custom_call.1} parent=1 // pred_fallthru
      _
    // Predicated region
    $region26: #{tpu_custom_call.1} parent=1 // pred_check
      _
    $region27: #{tpu_custom_call.1} parent=1 // pred_check_branch
      %27 = sbr.rel (0) target = $region29
    $region28: #{tpu_custom_call.1} parent=1 // pred_region
      _
    $region29: #{tpu_custom_call.1} parent=1 // pred_fallthru
      _
    // Predicated region
    $region30: #{tpu_custom_call.1} parent=1 // pred_check
      _
    $region31: #{tpu_custom_call.1} parent=1 // pred_check_branch
      %29 = sbr.rel (0) target = $region33
    $region32: #{tpu_custom_call.1} parent=1 // pred_region
      _
    $region33: #{tpu_custom_call.1} parent=1 // pred_fallthru
      _
    %p30 = scmp.eq.s32.totalorder 0, 0
    %p31 = scmp.eq.s32.totalorder 0, 0
    %p32 = pnand %p30, %p31
    %p33 = pneg %p32
    // Predicated region
    $region34: #{tpu_custom_call.1} parent=1 // pred_check
      _
    $region35: #{tpu_custom_call.1} parent=1 // pred_check_branch
      %35 = sbr.rel (%p32) target = $region37
    $region36: #{tpu_custom_call.1} parent=1 // pred_region
      %vm36 = vcmask 57344
      %37 = vst.msk [vmem:[#allocation3] sm:$0x1] %vm36, 0.0
      %38 = vst.msk [vmem:[#allocation4] sm:$0x1] %vm36, 0.0
      %39 = vst.msk [vmem:[#allocation5] sm:$0x1] %vm36, 0.0
    $region37: #{tpu_custom_call.1} parent=1 // pred_fallthru
      _
    // Predicated region
    $region38: #{tpu_custom_call.1} parent=1 // pred_check
      %p40 = pneg %p31
    $region39: #{tpu_custom_call.1} parent=1 // pred_check_branch
      %42 = sbr.rel (%p40) target = $region41
    $region40: #{tpu_custom_call.1} parent=1 // pred_region
      %vm43 = vcmask 64512
      %44 = vst.msk [vmem:[#allocation2] sm:$0xff] %vm43, 0.0
      %45 = vst.msk [vmem:[#allocation2 + $0x8] sm:$0xff] %vm43, 0.0
    $region41: #{tpu_custom_call.1} parent=1 // pred_fallthru
      _
    %v46 = vld [vmem:[#allocation2] sm:$0xff]
    %v47 = vld [vmem:[#allocation2 + $0x8] sm:$0xff]
    %v48 = vld [vmem:[%s0] sm:$0xf]
    %v49 = vld [vmem:[%s0 + $0x4] sm:$0xf]
    %v50 = vld [vmem:[%s1] sm:$0xf]
    %v51 = vld [vmem:[%s1 + $0x4] sm:$0xf]
    %v52 = vld [vmem:[%s1 + $0x8] sm:$0xf]
    %v53 = vld [vmem:[%s1 + $0xc] sm:$0xf]
    %v54 = vld [vmem:[%s1 + $0x10] sm:$0xf]
    %v55 = vld [vmem:[%s1 + $0x14] sm:$0xf]
    %v56 = vld [vmem:[%s1 + $0x18] sm:$0xf]
    %v57 = vld [vmem:[%s1 + $0x1c] sm:$0xf]
    %v58 = vld [vmem:[%s1 + $0x20] sm:$0xf]
    %v59 = vld [vmem:[%s1 + $0x24] sm:$0xf]
    %v60 = vld [vmem:[%s1 + $0x28] sm:$0xf]
    %v61 = vld [vmem:[%s1 + $0x2c] sm:$0xf]
    %v62 = vld [vmem:[%s1 + $0x30] sm:$0xf]
    %v63 = vld [vmem:[%s1 + $0x34] sm:$0xf]
    %v64 = vld [vmem:[%s1 + $0x38] sm:$0xf]
    %v65 = vld [vmem:[%s1 + $0x3c] sm:$0xf]
    %v68 = vunpack.c.l.b16 %v48
    %v69 = vunpack.c.l.b16 %v49
    %v70 = vpack.c.b16 %v69, %v68
    %v88 = vunpack.c.l.b16 %v50
    %v89 = vunpack.c.l.b16 %v51
    %v90 = vunpack.c.l.b16 %v52
    %v91 = vunpack.c.l.b16 %v53
    %v92 = vunpack.c.l.b16 %v54
    %v93 = vunpack.c.l.b16 %v55
    %v94 = vunpack.c.l.b16 %v56
    %v95 = vunpack.c.l.b16 %v57
    %v96 = vunpack.c.l.b16 %v58
    %v97 = vunpack.c.l.b16 %v59
    %v98 = vunpack.c.l.b16 %v60
    %v99 = vunpack.c.l.b16 %v61
    %v100 = vunpack.c.l.b16 %v62
    %v101 = vunpack.c.l.b16 %v63
    %v102 = vunpack.c.l.b16 %v64
    %v103 = vunpack.c.l.b16 %v65
    %v104 = vpack.c.b16 %v89, %v88
    %v105 = vpack.c.b16 %v91, %v90
    %v106 = vpack.c.b16 %v93, %v92
    %v107 = vpack.c.b16 %v95, %v94
    %v108 = vpack.c.b16 %v97, %v96
    %v109 = vpack.c.b16 %v99, %v98
    %v110 = vpack.c.b16 %v101, %v100
    %v111 = vpack.c.b16 %v103, %v102
    %120 = vmatpush.bf16.msra.mxu0 %v111
    %121 = vmatpush.bf16.msra.mxu0 %v110
    %122 = vmatpush.bf16.msra.mxu0 %v109
    %123 = vmatpush.bf16.msra.mxu0 %v108
    %124 = vmatpush.bf16.msra.mxu0 %v107
    %125 = vmatpush.bf16.msra.mxu0 %v106
    %126 = vmatpush.bf16.msra.mxu0 %v105
    %127 = vmatpush.bf16.msra.mxu0 %v104
    %128 = vmatmul.bf16.gmra.mxu0 %v70
    %v129 = vpop.f32.mrf.mxu0
    %v130 = vadd.f32 0.0, %v129
    %v131 = vpop.f32.mrf.mxu0
    %v132 = vadd.f32 0.0, %v131
    %133 = vdwg.mxu0
    %v134 = vadd.f32 %v46, %v130
    %v135 = vadd.f32 %v47, %v132
    %vm136 = vcmask 64512
    %137 = vst.msk [vmem:[#allocation2] sm:$0xff] %vm136, %v134
    %138 = vst.msk [vmem:[#allocation2 + $0x8] sm:$0xff] %vm136, %v135
    // Predicated region
    $region42: #{tpu_custom_call.1} parent=1 // pred_check
      %p139 = pneg %p31
    $region43: #{tpu_custom_call.1} parent=1 // pred_check_branch
      %141 = sbr.rel (%p139) target = $region45
    $region44: #{tpu_custom_call.1} parent=1 // pred_region
      %v142 = vld [vmem:[#allocation2] sm:$0xff]
      %v143 = vld [vmem:[#allocation2 + $0x8] sm:$0xff]
      %v144 = vld [vmem:[%s2] sm:$0xff]
      %v145 = vld [vmem:[%s2 + $0x8] sm:$0xff]
      %147 = vset.pattern.permute.xlu0 0
      %148 = vperm.xlu0 %147, %v144
      %v149 = vpop.permute.xlu0 %148
      %152 = vset.pattern.permute.xlu0 0
      %153 = vperm.xlu0 %152, %v145
      %v154 = vpop.permute.xlu0 %153
      %v156 = vmul.f32 %v142, %v149
      %v157 = vmul.f32 %v143, %v154
      %v158 = vld [vmem:[%s3] sm:$0x1]
      %v160 = vperm.slane %v158, 0
      %v162 = vmul.f32 %v156, %v160
      %v163 = vmul.f32 %v157, %v160
      %v164 = vadd.f32 %v162, 0.25
      %v165 = vadd.f32 %v163, 0.25
      %v166 = vld [vmem:[%s4] sm:$0xff]
      %v167 = vld [vmem:[%s4 + $0x8] sm:$0xff]
      %v168 = vld [vmem:[%s5] sm:$0x1]
      %s169 = smul.u32 0, 16
      %v170 = vlaneseq
      %v171 = vshrl.u32 %v170, 7
      %v172 = vadd.s32 %v171, 8
      %v173 = vstv %s169
      %v174 = vadd.s32 %v173, %v171
      %v175 = vadd.s32 %v173, %v172
      %vm176 = vcmp.lt.s32.totalorder %v174, 8
      %vm177 = vcmp.lt.s32.totalorder %v175, 8
      %178 = vset.pattern.permute.xlu0 0
      %179 = vperm.xlu0 %178, %v166
      %v180 = vpop.permute.xlu0 %179
      %181 = vset.pattern.permute.xlu0 0
      %182 = vperm.xlu0 %181, %v167
      %v183 = vpop.permute.xlu0 %182
      %v184 = vperm.slane %v168, 0
      %vm185 = vcmp.ne.s32.totalorder %v180, %v184
      %vm186 = vcmp.ne.s32.totalorder %v183, %v184
      %v187 = vsel %vm176, 1, 0
      %v188 = vsel %vm177, 1, 0
      %vm189 = vcmp.eq.s32.totalorder %v187, 1
      %vm190 = vcmp.eq.s32.totalorder %v188, 1
      %vm191 = vmand %vm185, %vm189
      %vm192 = vmand %vm186, %vm190
      %v193 = vsel %vm191, %v164, -inf
      %v194 = vsel %vm192, %v165, -inf
      %v195 = vld [vmem:[#allocation3] sm:$0x1]
      %v196 = vsel %vm136, %v193, -inf
      %v197 = vsel %vm136, %v194, -inf
      %v198 = vmax.f32 %v196, %v197
      %v199 = vrot.slane %v198, 4
      %v200 = vmax.f32 %v198, %v199
      %v201 = vrot.slane %v200, 2
      %v202 = vmax.f32 %v200, %v201
      %v203 = vrot.slane %v202, 1
      %v204 = vmax.f32 %v202, %v203
      %v205 = vmax.f32 %v195, %v204
      %v206 = vsub.f32 %v195, %v205
      %v207 = vmul.f32 %v206, 1.442695
      %v208 = vpow.pop %v207
      %v209 = vld [vmem:[#allocation4] sm:$0x1]
      %v210 = vmul.f32 %v208, %v209
      %v212 = vperm.slane %v205, 0
      %v214 = vsub.f32 %v193, %v212
      %v215 = vsub.f32 %v194, %v212
      %v216 = vmul.f32 %v214, 1.442695
      %v217 = vpow.pop %v216
      %v218 = vmul.f32 %v215, 1.442695
      %v219 = vpow.pop %v218
      %v220 = vsel %vm136, %v217, 0.0
      %v221 = vsel %vm136, %v219, 0.0
      %v222 = vadd.f32 %v220, %v221
      %v223 = vrot.slane %v222, 4
      %v224 = vadd.f32 %v222, %v223
      %v225 = vrot.slane %v224, 2
      %v226 = vadd.f32 %v224, %v225
      %v227 = vrot.slane %v226, 1
      %v228 = vadd.f32 %v226, %v227
      %v229 = vadd.f32 %v210, %v228
      %vm230 = vcmask 57344
      %231 = vst.msk [vmem:[#allocation4] sm:$0x1] %vm230, %v229
      %232 = vst.msk [vmem:[#allocation3] sm:$0x1] %vm230, %v205
      %v233 = vld [vmem:[%s6] sm:$0x1]
      %v234 = vperm.slane %v233, 0
      %vm235 = vcmp.eq.s32.totalorder %v174, %v234
      %vm236 = vcmp.eq.s32.totalorder %v175, %v234
      %v237 = vld [vmem:[#allocation5] sm:$0x1]
      %v238 = vsel %vm235, %v164, 0.0
      %v239 = vsel %vm236, %v165, 0.0
      %v240 = vsel %vm136, %v238, 0.0
      %v241 = vsel %vm136, %v239, 0.0
      %v242 = vadd.f32 %v240, %v241
      %v243 = vrot.slane %v242, 4
      %v244 = vadd.f32 %v242, %v243
      %v245 = vrot.slane %v244, 2
      %v246 = vadd.f32 %v244, %v245
      %v247 = vrot.slane %v246, 1
      %v248 = vadd.f32 %v246, %v247
      %v249 = vadd.f32 %v237, %v248
      %250 = vst.msk [vmem:[#allocation5] sm:$0x1] %vm230, %v249
    $region45: #{tpu_custom_call.1} parent=1 // pred_fallthru
      _
    // Predicated region
    $region46: #{tpu_custom_call.1} parent=1 // pred_check
      _
    $region47: #{tpu_custom_call.1} parent=1 // pred_check_branch
      %252 = sbr.rel (%p32) target = $region49
    $region48: #{tpu_custom_call.1} parent=1 // pred_region
      %v253 = vld [vmem:[#allocation5] sm:$0x1]
      %v254 = vld [vmem:[#allocation3] sm:$0x1]
      %v255 = vmax.f32 %v254, %v253
      %v256 = vsub.f32 %v253, %v255
      %v257 = vmul.f32 %v256, 1.442695
      %v258 = vpow.pop %v257
      %v259 = vld [vmem:[#allocation4] sm:$0x1]
      %v260 = vsub.f32 %v254, %v255
      %v261 = vmul.f32 %v260, 1.442695
      %v262 = vpow.pop %v261
      %v263 = vmul.f32 %v259, %v262
      %v264 = vadd.f32 %v258, %v263
      %v265 = vld [vmem:[%s7] sm:$0x1]
      %v266 = vsub.f32 0.0, %v255
      %v267 = vmul.f32 %v266, 1.442695
      %v268 = vpow.pop %v267
      %v269 = vmul.f32 %v265, %v268
      %v270 = vadd.f32 %v264, %v269
      %v271 = vlog2.pop %v270
      %v272 = vmul.f32 %v271, 0.6931472
      %v273 = vadd.f32 %v255, %v272
      %v274 = vsub.f32 %v273, %v253
      %vm275 = vcmask 57344
      %276 = vst.msk [vmem:[#allocation6] sm:$0x1] %vm275, %v274
    $region49: #{tpu_custom_call.1} parent=1 // pred_fallthru
      _
    // Predicated region
    $region50: #{tpu_custom_call.1} parent=1 // pred_check
      _
    $region51: #{tpu_custom_call.1} parent=1 // pred_check_branch
      %278 = sbr.rel (0) target = $region53
    $region52: #{tpu_custom_call.1} parent=1 // pred_region
      %280 = vsyncadd [#allocation7], 0
      %s282 = sshll.u32 [#allocation6], 4
      %s283 = int_to_ptr.vmem [resolvable:$true] %s282
      %s284 = sshll.u32 %s8, 4
      %s285 = int_to_ptr.hbm [resolvable:$true] %s284
      %287 = dma.vmem_to_hbm [thread:$0]  %s283, 16, %s285, [#allocation7]
    $region53: #{tpu_custom_call.1} parent=1 // pred_fallthru
      _
    // Predicated region
    $region54: #{tpu_custom_call.1} parent=1 // pred_check
      _
    $region55: #{tpu_custom_call.1} parent=1 // pred_check_branch
      %289 = sbr.rel (0) target = $region57
    $region56: #{tpu_custom_call.1} parent=1 // pred_region
      %291 = dma.done [#allocation7], 16
    $region57: #{tpu_custom_call.1} parent=1 // pred_fallthru
      _
    %292 = vsyncpa [#allocation7], 1

</llo_original>
